<compile_context>
chip_gen: v6e
topology: v6e:2x2x1
jax: 0.10.0
libtpu: 0.0.40
codegen_flags: <defaults>
</compile_context>

<pallas_src>
import functools

import jax
import jax.numpy as jnp
from jax.experimental import pallas as pl
from jax.experimental.pallas import tpu as pltpu

IN_DIM = 310  # fixed by nn.Linear(310, hidden_1)


def _round_up(n, m):
    return ((n + m - 1) // m) * m


def _dam_kernel(x_ref, w1_ref, b1_ref, w2_ref, b2_ref, wc_ref, bc_ref,
                out_ref, *, num_class, hidden_2):
    x = x_ref[...]

    # feature extractor: Linear -> ReLU -> Linear -> ReLU
    h = jnp.dot(x, w1_ref[...], preferred_element_type=jnp.float32) + b1_ref[...]
    h = jnp.maximum(h, 0.0)
    h = jnp.dot(h, w2_ref[...], preferred_element_type=jnp.float32) + b2_ref[...]
    feat = jnp.maximum(h, 0.0)

    # classifier logits
    logits = jnp.dot(feat, wc_ref[...], preferred_element_type=jnp.float32) + bc_ref[...]

    # softmax over the (unpadded) class columns
    m = jnp.max(logits, axis=1, keepdims=True)
    e = jnp.exp(logits - m)
    soft = e / jnp.sum(e, axis=1, keepdims=True)

    # fused, lane-dense output slab: [feat | logits | soft | 0-pad] -> 128 lanes
    out_ref[...] = jnp.zeros_like(out_ref)
    out_ref[:, 0:hidden_2] = feat
    out_ref[:, hidden_2:hidden_2 + num_class] = logits
    out_ref[:, hidden_2 + num_class:hidden_2 + 2 * num_class] = soft


@functools.partial(jax.jit, static_argnames=())
def domain_adaption_forward(source, target, params, source_label=None):
    """source, target: (B, 310) float32.  params: weights pre-transposed to
    (in_features, out_features).  source_label is unused (as in PyTorch)."""
    del source_label  # unused, matches the PyTorch forward
    B, in_dim = source.shape
    h1 = params["w1"].shape[1]
    h2 = params["w2"].shape[1]
    C = params["wc"].shape[1]

    # stack source + target: one MLP / classifier / softmax pass
    x = jnp.concatenate([source, target], axis=0)
    rows = 2 * B

    # Row tile: big (512) for bandwidth + megacore sharding at production
    # sizes; whole batch as one tile when the batch is small.
    if rows <= 512:
        row_block = _round_up(rows, 8)
        rows_p = row_block
    else:
        row_block = 512
        rows_p = _round_up(rows, row_block)
    if rows_p != rows:
        x = jnp.pad(x, ((0, rows_p - rows), (0, 0)))

    # fused output width (feat | logits | soft), padded up to a lane-dense 128
    fused_w = h2 + 2 * C
    out_w = max(128, _round_up(fused_w, 128))

    w1 = params["w1"]
    b1 = params["b1"].reshape(1, h1)
    w2 = params["w2"]
    b2 = params["b2"].reshape(1, h2)
    wc = params["wc"]
    bc = params["bc"].reshape(1, C)

    grid = (rows_p // row_block,)

    def row_spec(cols):
        return pl.BlockSpec((row_block, cols), lambda i: (i, 0))

    def full_spec(shape):
        return pl.BlockSpec(shape, lambda i: (0,) * len(shape))

    kernel = functools.partial(_dam_kernel, num_class=C, hidden_2=h2)

    weight_bytes = 4 * (in_dim * h1 + h1 * h2 + h2 * C + h1 + h2 + C)
    cost = pl.CostEstimate(
        flops=int(2 * rows_p * (in_dim * h1 + h1 * h2 + h2 * C)),
        transcendentals=int(rows_p * C),
        bytes_accessed=int(rows_p * in_dim * 4 + weight_bytes + rows_p * out_w * 4),
    )

    fused = pl.pallas_call(
        kernel,
        out_shape=jax.ShapeDtypeStruct((rows_p, out_w), jnp.float32),
        grid=grid,
        in_specs=[
            row_spec(in_dim),            # x  (310 lanes, full-dim block: no pad)
            full_spec((in_dim, h1)),     # w1
            full_spec((1, h1)),          # b1
            full_spec((h1, h2)),         # w2
            full_spec((1, h2)),          # b2
            full_spec((h2, C)),          # wc
            full_spec((1, C)),           # bc
        ],
        out_specs=row_spec(out_w),       # single fused lane-dense output slab
        compiler_params=pltpu.CompilerParams(
            dimension_semantics=("parallel",)),
        cost_estimate=cost,
    )(x, w1, b1, w2, b2, wc, bc)

    # slice the fused slab back into the five module outputs (fuses under jit)
    feat_all = fused[:rows, 0:h2]
    logits_all = fused[:rows, h2:h2 + C]
    soft_all = fused[:rows, h2 + C:h2 + 2 * C]

    source_predict = logits_all[:B]
    feature_source_f = feat_all[:B]
    feature_target_f = feat_all[B:]
    source_label_feature = soft_all[:B]
    target_label_feature = soft_all[B:]
    return (source_predict, feature_source_f, feature_target_f,
            source_label_feature, target_label_feature)


def init_params(key, hidden_1, hidden_2, num_of_class):
    """PyTorch-style Linear init: U(-1/sqrt(fan_in), 1/sqrt(fan_in)).
    Weights stored pre-transposed as (in_features, out_features)."""
    ks = jax.random.split(key, 6)

    def linear(kw, kb, fan_in, fan_out):
        bound = 1.0 / jnp.sqrt(jnp.float32(fan_in))
        w = jax.random.uniform(kw, (fan_in, fan_out), jnp.float32, -bound, bound)
        b = jax.random.uniform(kb, (fan_out,), jnp.float32, -bound, bound)
        return w, b

    w1, b1 = linear(ks[0], ks[1], IN_DIM, hidden_1)
    w2, b2 = linear(ks[2], ks[3], hidden_1, hidden_2)
    wc, bc = linear(ks[4], ks[5], hidden_2, num_of_class)
    return {"w1": w1, "b1": b1, "w2": w2, "b2": b2, "wc": wc, "bc": bc}


def reference_forward(source, target, params):
    hi = jax.lax.Precision.HIGHEST

    def feat(x):
        h = jnp.maximum(jnp.dot(x, params["w1"], precision=hi) + params["b1"], 0.0)
        return jnp.maximum(jnp.dot(h, params["w2"], precision=hi) + params["b2"], 0.0)

    fs, ft = feat(source), feat(target)
    ps = jnp.dot(fs, params["wc"], precision=hi) + params["bc"]
    pt = jnp.dot(ft, params["wc"], precision=hi) + params["bc"]
    return ps, fs, ft, jax.nn.softmax(ps, axis=1), jax.nn.softmax(pt, axis=1)


if __name__ == "__main__":
    # small config consistent with the module: hidden_1=64, hidden_2=32, 4 classes
    hidden_1, hidden_2, num_of_class = 64, 32, 4
    B = 8

    key = jax.random.PRNGKey(0)
    k_src, k_tgt, k_params = jax.random.split(key, 3)
    source = jax.random.normal(k_src, (B, IN_DIM), jnp.float32)
    target = jax.random.normal(k_tgt, (B, IN_DIM), jnp.float32)
    source_label = jnp.zeros((B, num_of_class), jnp.float32)  # unused, as in PyTorch
    params = init_params(k_params, hidden_1, hidden_2, num_of_class)

    outs = domain_adaption_forward(source, target, params, source_label)
    outs = jax.block_until_ready(outs)

    refs = reference_forward(source, target, params)
    tols = (1e-4, 1e-4, 1e-4, 1e-3, 1e-3)
    for o, r, tol in zip(outs, refs, tols):
        assert o.shape == r.shape, (o.shape, r.shape)
        assert jnp.max(jnp.abs(o - r)) < tol

    print("KERNEL_OK")
</pallas_src>

<mosaic_0001>
module attributes {stable_mosaic.version = 11 : i64} {
  func.func @_dam_kernel(%arg0: i32, %arg1: memref<16x310xf32, #tpu.memory_space<vmem>>, %arg2: memref<310x64xf32, #tpu.memory_space<vmem>>, %arg3: memref<1x64xf32, #tpu.memory_space<vmem>>, %arg4: memref<64x32xf32, #tpu.memory_space<vmem>>, %arg5: memref<1x32xf32, #tpu.memory_space<vmem>>, %arg6: memref<32x4xf32, #tpu.memory_space<vmem>>, %arg7: memref<1x4xf32, #tpu.memory_space<vmem>>, %arg8: memref<16x128xf32, #tpu.memory_space<vmem>>) attributes {dimension_semantics = [#tpu.dimension_semantics<parallel>], iteration_bounds = array<i64: 1>, scalar_prefetch = 0 : i64, scratch_operands = 0 : i64, tpu.core_type = #tpu.core_type<tc>, window_params = [{transform_indices = @transform_0, window_bounds = array<i64: 16, 310>}, {pipeline_mode = #tpu.pipeline_mode<synchronous>, transform_indices = @transform_1, window_bounds = array<i64: 310, 64>}, {pipeline_mode = #tpu.pipeline_mode<synchronous>, transform_indices = @transform_2, window_bounds = array<i64: 1, 64>}, {pipeline_mode = #tpu.pipeline_mode<synchronous>, transform_indices = @transform_3, window_bounds = array<i64: 64, 32>}, {pipeline_mode = #tpu.pipeline_mode<synchronous>, transform_indices = @transform_4, window_bounds = array<i64: 1, 32>}, {pipeline_mode = #tpu.pipeline_mode<synchronous>, transform_indices = @transform_5, window_bounds = array<i64: 32, 4>}, {pipeline_mode = #tpu.pipeline_mode<synchronous>, transform_indices = @transform_6, window_bounds = array<i64: 1, 4>}, {transform_indices = @transform_7, window_bounds = array<i64: 16, 128>}]} {
    %c0 = arith.constant 0 : index
    %c0_0 = arith.constant 0 : index
    %0 = vector.load %arg1[%c0, %c0_0] : memref<16x310xf32, #tpu.memory_space<vmem>>, vector<16x310xf32>
    %c0_1 = arith.constant 0 : index
    %c0_2 = arith.constant 0 : index
    %1 = vector.load %arg2[%c0_1, %c0_2] : memref<310x64xf32, #tpu.memory_space<vmem>>, vector<310x64xf32>
    %cst = arith.constant dense<0.000000e+00> : vector<16x64xf32>
    %2 = tpu.matmul %0, %1, %cst {dimension_numbers = #tpu.dot_dimension_numbers<[1], [0], [0], [1], [0, 0, 1, 1], [], []>} : vector<16x310xf32>, vector<310x64xf32>, vector<16x64xf32> -> vector<16x64xf32>
    %c0_3 = arith.constant 0 : index
    %c0_4 = arith.constant 0 : index
    %3 = vector.load %arg3[%c0_3, %c0_4] : memref<1x64xf32, #tpu.memory_space<vmem>>, vector<1x64xf32>
    %4 = vector.broadcast %3 : vector<1x64xf32> to vector<16x64xf32>
    %5 = arith.addf %2, %4 : vector<16x64xf32>
    %cst_5 = arith.constant 0.000000e+00 : f32
    %6 = vector.broadcast %cst_5 : f32 to vector<16x64xf32>
    %7 = arith.maximumf %5, %6 : vector<16x64xf32>
    %c0_6 = arith.constant 0 : index
    %c0_7 = arith.constant 0 : index
    %8 = vector.load %arg4[%c0_6, %c0_7] : memref<64x32xf32, #tpu.memory_space<vmem>>, vector<64x32xf32>
    %cst_8 = arith.constant dense<0.000000e+00> : vector<16x32xf32>
    %9 = tpu.matmul %7, %8, %cst_8 {dimension_numbers = #tpu.dot_dimension_numbers<[1], [0], [0], [1], [0, 0, 1, 1], [], []>} : vector<16x64xf32>, vector<64x32xf32>, vector<16x32xf32> -> vector<16x32xf32>
    %c0_9 = arith.constant 0 : index
    %c0_10 = arith.constant 0 : index
    %10 = vector.load %arg5[%c0_9, %c0_10] : memref<1x32xf32, #tpu.memory_space<vmem>>, vector<1x32xf32>
    %11 = vector.broadcast %10 : vector<1x32xf32> to vector<16x32xf32>
    %12 = arith.addf %9, %11 : vector<16x32xf32>
    %cst_11 = arith.constant 0.000000e+00 : f32
    %13 = vector.broadcast %cst_11 : f32 to vector<16x32xf32>
    %14 = arith.maximumf %12, %13 : vector<16x32xf32>
    %c0_12 = arith.constant 0 : index
    %c0_13 = arith.constant 0 : index
    %15 = vector.load %arg6[%c0_12, %c0_13] : memref<32x4xf32, #tpu.memory_space<vmem>>, vector<32x4xf32>
    %cst_14 = arith.constant dense<0.000000e+00> : vector<16x4xf32>
    %16 = tpu.matmul %14, %15, %cst_14 {dimension_numbers = #tpu.dot_dimension_numbers<[1], [0], [0], [1], [0, 0, 1, 1], [], []>} : vector<16x32xf32>, vector<32x4xf32>, vector<16x4xf32> -> vector<16x4xf32>
    %c0_15 = arith.constant 0 : index
    %c0_16 = arith.constant 0 : index
    %17 = vector.load %arg7[%c0_15, %c0_16] : memref<1x4xf32, #tpu.memory_space<vmem>>, vector<1x4xf32>
    %18 = vector.broadcast %17 : vector<1x4xf32> to vector<16x4xf32>
    %19 = arith.addf %16, %18 : vector<16x4xf32>
    %cst_17 = arith.constant dense<0xFF800000> : vector<16xf32>
    %20 = vector.multi_reduction <maximumf>, %19, %cst_17 [1] : vector<16x4xf32> to vector<16xf32>
    %21 = vector.shape_cast %20 : vector<16xf32> to vector<16x1xf32>
    %22 = vector.broadcast %21 : vector<16x1xf32> to vector<16x4xf32>
    %23 = arith.subf %19, %22 : vector<16x4xf32>
    %24 = math.exp %23 : vector<16x4xf32>
    %cst_18 = arith.constant dense<0.000000e+00> : vector<16xf32>
    %25 = vector.multi_reduction <add>, %24, %cst_18 [1] : vector<16x4xf32> to vector<16xf32>
    %26 = vector.shape_cast %25 : vector<16xf32> to vector<16x1xf32>
    %27 = vector.broadcast %26 : vector<16x1xf32> to vector<16x4xf32>
    %28 = arith.divf %24, %27 : vector<16x4xf32>
    %cst_19 = arith.constant 0.000000e+00 : f32
    %29 = vector.broadcast %cst_19 : f32 to vector<16x128xf32>
    %c0_20 = arith.constant 0 : index
    %c0_21 = arith.constant 0 : index
    %30 = vector.load %arg8[%c0_20, %c0_21] : memref<16x128xf32, #tpu.memory_space<vmem>>, vector<16x128xf32>
    tpu.vector_store %arg8[%c0_20, %c0_21], %29 {strides = array<i32>} : memref<16x128xf32, #tpu.memory_space<vmem>>, vector<16x128xf32>,
    %c0_22 = arith.constant 0 : index
    %c0_23 = arith.constant 0 : index
    %31 = vector.load %arg8[%c0_22, %c0_23] : memref<16x128xf32, #tpu.memory_space<vmem>>, vector<16x32xf32>
    tpu.vector_store %arg8[%c0_22, %c0_23], %14 {strides = array<i32>} : memref<16x128xf32, #tpu.memory_space<vmem>>, vector<16x32xf32>,
    %c0_24 = arith.constant 0 : index
    %c32 = arith.constant 32 : index
    %32 = vector.load %arg8[%c0_24, %c32] : memref<16x128xf32, #tpu.memory_space<vmem>>, vector<16x4xf32>
    tpu.vector_store %arg8[%c0_24, %c32], %19 {strides = array<i32>} : memref<16x128xf32, #tpu.memory_space<vmem>>, vector<16x4xf32>,
    %c0_25 = arith.constant 0 : index
    %c36 = arith.constant 36 : index
    %33 = vector.load %arg8[%c0_25, %c36] : memref<16x128xf32, #tpu.memory_space<vmem>>, vector<16x4xf32>
    tpu.vector_store %arg8[%c0_25, %c36], %28 {strides = array<i32>} : memref<16x128xf32, #tpu.memory_space<vmem>>, vector<16x4xf32>,
    return
  }
  func.func @transform_0(%arg0: i32) -> (i32, i32) {
    %c0_i32 = arith.constant 0 : i32
    %c0_i32_0 = arith.constant 0 : i32
    return %arg0, %c0_i32 : i32, i32
  }
  func.func @transform_1(%arg0: i32) -> (i32, i32) {
    %c0_i32 = arith.constant 0 : i32
    %c0_i32_0 = arith.constant 0 : i32
    %c0_i32_1 = arith.constant 0 : i32
    return %c0_i32, %c0_i32_0 : i32, i32
  }
  func.func @transform_2(%arg0: i32) -> (i32, i32) {
    %c0_i32 = arith.constant 0 : i32
    %c0_i32_0 = arith.constant 0 : i32
    %c0_i32_1 = arith.constant 0 : i32
    return %c0_i32, %c0_i32_0 : i32, i32
  }
  func.func @transform_3(%arg0: i32) -> (i32, i32) {
    %c0_i32 = arith.constant 0 : i32
    %c0_i32_0 = arith.constant 0 : i32
    %c0_i32_1 = arith.constant 0 : i32
    return %c0_i32, %c0_i32_0 : i32, i32
  }
  func.func @transform_4(%arg0: i32) -> (i32, i32) {
    %c0_i32 = arith.constant 0 : i32
    %c0_i32_0 = arith.constant 0 : i32
    %c0_i32_1 = arith.constant 0 : i32
    return %c0_i32, %c0_i32_0 : i32, i32
  }
  func.func @transform_5(%arg0: i32) -> (i32, i32) {
    %c0_i32 = arith.constant 0 : i32
    %c0_i32_0 = arith.constant 0 : i32
    %c0_i32_1 = arith.constant 0 : i32
    return %c0_i32, %c0_i32_0 : i32, i32
  }
  func.func @transform_6(%arg0: i32) -> (i32, i32) {
    %c0_i32 = arith.constant 0 : i32
    %c0_i32_0 = arith.constant 0 : i32
    %c0_i32_1 = arith.constant 0 : i32
    return %c0_i32, %c0_i32_0 : i32, i32
  }
  func.func @transform_7(%arg0: i32) -> (i32, i32) {
    %c0_i32 = arith.constant 0 : i32
    %c0_i32_0 = arith.constant 0 : i32
    return %arg0, %c0_i32 : i32, i32
  }
}

</mosaic_0001>

<llo_original>
// kernel: domain_adaption_forward.1
$region0: #{domain_adaption_forward.1}
  #allocation0 [shape = 'u32[]', space=smem, size = 0x4, offset = 0x4, fixed_abs, tag = 'smem constant byte address 0x4 - core index']
  #allocation1 [shape = 'u32[144,128]{1,0:T(1,128)}', space=vmem, size = 0x12000, scoped, tag = 'internal scratch']
  %s0 = inlined_call_operand.vmem [shape: f32[16,310], index: 0, kind: input, shape index: {}]
  %s1 = inlined_call_operand.vmem [shape: f32[310,64], index: 1, kind: input, shape index: {}]
  %s2 = inlined_call_operand.vmem [shape: f32[1,64], index: 2, kind: input, shape index: {}]
  %s3 = inlined_call_operand.vmem [shape: f32[64,32], index: 3, kind: input, shape index: {}]
  %s4 = inlined_call_operand.vmem [shape: f32[1,32], index: 4, kind: input, shape index: {}]
  %s5 = inlined_call_operand.vmem [shape: f32[32,4], index: 5, kind: input, shape index: {}]
  %s6 = inlined_call_operand.vmem [shape: f32[1,4], index: 6, kind: input, shape index: {}]
  %s7 = inlined_call_operand.vmem [shape: f32[16,128], index: 7, kind: output, shape index: {}]
  %s8 = sld [smem:[#allocation0]]
  $region38: #{domain_adaption_forward.1} parent=0
    _
  %s10 = ssub.s32 1, %s8
  %s11 = scalar_select 0, %s10, %s8
  // Predicated region
  $region2: #{domain_adaption_forward.1} parent=0 // pred_check
    _
  $region3: #{domain_adaption_forward.1} parent=0 // pred_check_branch
    %13 = sbr.rel (0) target = $region5
  $region4: #{domain_adaption_forward.1} parent=0 // pred_region
    _
  $region5: #{domain_adaption_forward.1} parent=0 // pred_fallthru
    _
  // Predicated region
  $region6: #{domain_adaption_forward.1} parent=0 // pred_check
    _
  $region7: #{domain_adaption_forward.1} parent=0 // pred_check_branch
    %15 = sbr.rel (0) target = $region9
  $region8: #{domain_adaption_forward.1} parent=0 // pred_region
    _
  $region9: #{domain_adaption_forward.1} parent=0 // pred_fallthru
    _
  // Predicated region
  $region10: #{domain_adaption_forward.1} parent=0 // pred_check
    _
  $region11: #{domain_adaption_forward.1} parent=0 // pred_check_branch
    %17 = sbr.rel (0) target = $region13
  $region12: #{domain_adaption_forward.1} parent=0 // pred_region
    _
  $region13: #{domain_adaption_forward.1} parent=0 // pred_fallthru
    _
  // Predicated region
  $region14: #{domain_adaption_forward.1} parent=0 // pred_check
    _
  $region15: #{domain_adaption_forward.1} parent=0 // pred_check_branch
    %19 = sbr.rel (0) target = $region17
  $region16: #{domain_adaption_forward.1} parent=0 // pred_region
    _
  $region17: #{domain_adaption_forward.1} parent=0 // pred_fallthru
    _
  // Predicated region
  $region18: #{domain_adaption_forward.1} parent=0 // pred_check
    _
  $region19: #{domain_adaption_forward.1} parent=0 // pred_check_branch
    %21 = sbr.rel (0) target = $region21
  $region20: #{domain_adaption_forward.1} parent=0 // pred_region
    _
  $region21: #{domain_adaption_forward.1} parent=0 // pred_fallthru
    _
  // Predicated region
  $region22: #{domain_adaption_forward.1} parent=0 // pred_check
    _
  $region23: #{domain_adaption_forward.1} parent=0 // pred_check_branch
    %23 = sbr.rel (0) target = $region25
  $region24: #{domain_adaption_forward.1} parent=0 // pred_region
    _
  $region25: #{domain_adaption_forward.1} parent=0 // pred_fallthru
    _
  // Predicated region
  $region26: #{domain_adaption_forward.1} parent=0 // pred_check
    _
  $region27: #{domain_adaption_forward.1} parent=0 // pred_check_branch
    %25 = sbr.rel (0) target = $region29
  $region28: #{domain_adaption_forward.1} parent=0 // pred_region
    _
  $region29: #{domain_adaption_forward.1} parent=0 // pred_fallthru
    _
  %v26 = vld [vmem:[%s0] sm:$0xff]
  %v27 = vld [vmem:[%s0 + $0x8] sm:$0xff]
  %v28 = vld [vmem:[%s0 + $0x10] sm:$0xff]
  %v29 = vld [vmem:[%s0 + $0x18] sm:$0xff]
  %v30 = vld [vmem:[%s0 + $0x20] sm:$0xff]
  %v31 = vld [vmem:[%s0 + $0x28] sm:$0xff]
  %v32 = vld [vmem:[%s1] sm:$0xff]
  %v33 = vld [vmem:[%s1 + $0x8] sm:$0xff]
  %v34 = vld [vmem:[%s1 + $0x10] sm:$0xff]
  %v35 = vld [vmem:[%s1 + $0x18] sm:$0xff]
  %v36 = vld [vmem:[%s1 + $0x20] sm:$0xff]
  %v37 = vld [vmem:[%s1 + $0x28] sm:$0xff]
  %v38 = vld [vmem:[%s1 + $0x30] sm:$0xff]
  %v39 = vld [vmem:[%s1 + $0x38] sm:$0xff]
  %v40 = vld [vmem:[%s1 + $0x40] sm:$0xff]
  %v41 = vld [vmem:[%s1 + $0x48] sm:$0xff]
  %v42 = vld [vmem:[%s1 + $0x50] sm:$0xff]
  %v43 = vld [vmem:[%s1 + $0x58] sm:$0xff]
  %v44 = vld [vmem:[%s1 + $0x60] sm:$0xff]
  %v45 = vld [vmem:[%s1 + $0x68] sm:$0xff]
  %v46 = vld [vmem:[%s1 + $0x70] sm:$0xff]
  %v47 = vld [vmem:[%s1 + $0x78] sm:$0xff]
  %v48 = vld [vmem:[%s1 + $0x80] sm:$0xff]
  %v49 = vld [vmem:[%s1 + $0x88] sm:$0xff]
  %v50 = vld [vmem:[%s1 + $0x90] sm:$0xff]
  %v51 = vld [vmem:[%s1 + $0x98] sm:$0xff]
  %v52 = vld [vmem:[%s1 + $0xa0] sm:$0xff]
  %v53 = vld [vmem:[%s1 + $0xa8] sm:$0xff]
  %v54 = vld [vmem:[%s1 + $0xb0] sm:$0xff]
  %v55 = vld [vmem:[%s1 + $0xb8] sm:$0xff]
  %v56 = vld [vmem:[%s1 + $0xc0] sm:$0xff]
  %v57 = vld [vmem:[%s1 + $0xc8] sm:$0xff]
  %v58 = vld [vmem:[%s1 + $0xd0] sm:$0xff]
  %v59 = vld [vmem:[%s1 + $0xd8] sm:$0xff]
  %v60 = vld [vmem:[%s1 + $0xe0] sm:$0xff]
  %v61 = vld [vmem:[%s1 + $0xe8] sm:$0xff]
  %v62 = vld [vmem:[%s1 + $0xf0] sm:$0xff]
  %v63 = vld [vmem:[%s1 + $0xf8] sm:$0xff]
  %v64 = vld [vmem:[%s1 + $0x100] sm:$0xff]
  %v65 = vld [vmem:[%s1 + $0x108] sm:$0xff]
  %v66 = vld [vmem:[%s1 + $0x110] sm:$0xff]
  %v67 = vld [vmem:[%s1 + $0x118] sm:$0xff]
  %v68 = vld [vmem:[%s1 + $0x120] sm:$0xff]
  %v69 = vld [vmem:[%s1 + $0x128] sm:$0xff]
  %v70 = vld [vmem:[%s1 + $0x130] sm:$0x3f]
  %v71 = vld [vmem:[%s2] sm:$0x1]
  %v73 = vlaneseq
  %v74 = vshrl.u32 %v73, 7
  %v75 = vsub.s32 0, %v74
  %v76 = vrot.slane %v71, %v75
  %vm78 = vcmask 441344
  %v80 = vsel %vm78, %v28, 0
  %v83 = vsel %vm78, %v31, 0
  %vm85 = vcmask 1045504
  %v87 = vsel %vm85, %v70, 0
  %89 = vmatprep.subr.mxu0 0.0
  %90 = vmatpush1.msra.mxu0 %v47
  %91 = vmatprep.subr.mxu0 0.0
  %92 = vmatpush1.msra.mxu0 %v46
  %93 = vmatprep.subr.mxu0 0.0
  %94 = vmatpush1.msra.mxu0 %v45
  %95 = vmatprep.subr.mxu0 0.0
  %96 = vmatpush1.msra.mxu0 %v44
  %97 = vmatprep.subr.mxu0 0.0
  %98 = vmatpush1.msra.mxu0 %v43
  %99 = vmatprep.subr.mxu0 0.0
  %100 = vmatpush1.msra.mxu0 %v42
  %101 = vmatprep.subr.mxu0 0.0
  %102 = vmatpush1.msra.mxu0 %v41
  %103 = vmatprep.subr.mxu0 0.0
  %104 = vmatpush1.msra.mxu0 %v40
  %105 = vmatprep.subr.mxu0 0.0
  %106 = vmatpush1.msra.mxu0 %v39
  %107 = vmatprep.subr.mxu0 0.0
  %108 = vmatpush1.msra.mxu0 %v38
  %109 = vmatprep.subr.mxu0 0.0
  %110 = vmatpush1.msra.mxu0 %v37
  %111 = vmatprep.subr.mxu0 0.0
  %112 = vmatpush1.msra.mxu0 %v36
  %113 = vmatprep.subr.mxu0 0.0
  %114 = vmatpush1.msra.mxu0 %v35
  %115 = vmatprep.subr.mxu0 0.0
  %116 = vmatpush1.msra.mxu0 %v34
  %117 = vmatprep.subr.mxu0 0.0
  %118 = vmatpush1.msra.mxu0 %v33
  %119 = vmatprep.subr.mxu0 0.0
  %120 = vmatpush1.msra.mxu0 %v32
  %121 = vmatprep.subr.mxu0 0.0
  %122 = vmatpush2.msra.mxu0 %v63
  %123 = vmatprep.subr.mxu0 0.0
  %124 = vmatpush2.msra.mxu0 %v62
  %125 = vmatprep.subr.mxu0 0.0
  %126 = vmatpush2.msra.mxu0 %v61
  %127 = vmatprep.subr.mxu0 0.0
  %128 = vmatpush2.msra.mxu0 %v60
  %129 = vmatprep.subr.mxu0 0.0
  %130 = vmatpush2.msra.mxu0 %v59
  %131 = vmatprep.subr.mxu0 0.0
  %132 = vmatpush2.msra.mxu0 %v58
  %133 = vmatprep.subr.mxu0 0.0
  %134 = vmatpush2.msra.mxu0 %v57
  %135 = vmatprep.subr.mxu0 0.0
  %136 = vmatpush2.msra.mxu0 %v56
  %137 = vmatprep.subr.mxu0 0.0
  %138 = vmatpush2.msra.mxu0 %v55
  %139 = vmatprep.subr.mxu0 0.0
  %140 = vmatpush2.msra.mxu0 %v54
  %141 = vmatprep.subr.mxu0 0.0
  %142 = vmatpush2.msra.mxu0 %v53
  %143 = vmatprep.subr.mxu0 0.0
  %144 = vmatpush2.msra.mxu0 %v52
  %145 = vmatprep.subr.mxu0 0.0
  %146 = vmatpush2.msra.mxu0 %v51
  %147 = vmatprep.subr.mxu0 0.0
  %148 = vmatpush2.msra.mxu0 %v50
  %149 = vmatprep.subr.mxu0 0.0
  %150 = vmatpush2.msra.mxu0 %v49
  %151 = vmatprep.subr.mxu0 0.0
  %152 = vmatpush2.msra.mxu0 %v48
  %153 = vmatprep.mubr.f32.mxu0 %v27
  %154 = vmatmul.mubr.f32.gmra.mxu0 %v26
  %v155 = vpop.f32.mrf.mxu0
  %v156 = vadd.f32 %v76, %v155
  %v157 = vpop.f32.mrf.mxu0
  %158 = vmatprep.mubr.f32.mxu0 %v30
  %159 = vmatmul.mubr.f32.gmra.mxu0 %v29
  %v160 = vpop.f32.mrf.mxu0
  %v161 = vadd.f32 %v76, %v160
  %v162 = vpop.f32.mrf.mxu0
  %163 = vdwg.mxu0
  %164 = vmatprep.subr.mxu0 0.0
  %165 = vmatpush1.msra.mxu0 0.0
  %166 = vmatprep.subr.mxu0 0.0
  %167 = vmatpush1.msra.mxu0 0.0
  %168 = vmatprep.subr.mxu0 0.0
  %169 = vmatpush1.msra.mxu0 0.0
  %170 = vmatprep.subr.mxu0 0.0
  %171 = vmatpush1.msra.mxu0 0.0
  %172 = vmatprep.subr.mxu0 0.0
  %173 = vmatpush1.msra.mxu0 0.0
  %174 = vmatprep.subr.mxu0 0.0
  %175 = vmatpush1.msra.mxu0 0.0
  %176 = vmatprep.subr.mxu0 0.0
  %177 = vmatpush1.msra.mxu0 0.0
  %178 = vmatprep.subr.mxu0 0.0
  %179 = vmatpush1.msra.mxu0 0.0
  %180 = vmatprep.subr.mxu0 0.0
  %181 = vmatpush1.msra.mxu0 0.0
  %182 = vmatprep.subr.mxu0 0.0
  %183 = vmatpush1.msra.mxu0 %v87
  %184 = vmatprep.subr.mxu0 0.0
  %185 = vmatpush1.msra.mxu0 %v69
  %186 = vmatprep.subr.mxu0 0.0
  %187 = vmatpush1.msra.mxu0 %v68
  %188 = vmatprep.subr.mxu0 0.0
  %189 = vmatpush1.msra.mxu0 %v67
  %190 = vmatprep.subr.mxu0 0.0
  %191 = vmatpush1.msra.mxu0 %v66
  %192 = vmatprep.subr.mxu0 0.0
  %193 = vmatpush1.msra.mxu0 %v65
  %194 = vmatprep.subr.mxu0 0.0
  %195 = vmatpush1.msra.mxu0 %v64
  %196 = vmatprep.subr.mxu0 0.0
  %197 = vmatpush2.msra.mxu0 0.0
  %198 = vmatprep.subr.mxu0 0.0
  %199 = vmatpush2.msra.mxu0 0.0
  %200 = vmatprep.subr.mxu0 0.0
  %201 = vmatpush2.msra.mxu0 0.0
  %202 = vmatprep.subr.mxu0 0.0
  %203 = vmatpush2.msra.mxu0 0.0
  %204 = vmatprep.subr.mxu0 0.0
  %205 = vmatpush2.msra.mxu0 0.0
  %206 = vmatprep.subr.mxu0 0.0
  %207 = vmatpush2.msra.mxu0 0.0
  %208 = vmatprep.subr.mxu0 0.0
  %209 = vmatpush2.msra.mxu0 0.0
  %210 = vmatprep.subr.mxu0 0.0
  %211 = vmatpush2.msra.mxu0 0.0
  %212 = vmatprep.subr.mxu0 0.0
  %213 = vmatpush2.msra.mxu0 0.0
  %214 = vmatprep.subr.mxu0 0.0
  %215 = vmatpush2.msra.mxu0 0.0
  %216 = vmatprep.subr.mxu0 0.0
  %217 = vmatpush2.msra.mxu0 0.0
  %218 = vmatprep.subr.mxu0 0.0
  %219 = vmatpush2.msra.mxu0 0.0
  %220 = vmatprep.subr.mxu0 0.0
  %221 = vmatpush2.msra.mxu0 0.0
  %222 = vmatprep.subr.mxu0 0.0
  %223 = vmatpush2.msra.mxu0 0.0
  %224 = vmatprep.subr.mxu0 0.0
  %225 = vmatpush2.msra.mxu0 0.0
  %226 = vmatprep.subr.mxu0 0.0
  %227 = vmatpush2.msra.mxu0 0.0
  %228 = vmatprep.mubr.f32.mxu0 0.0
  %229 = vmatmul.mubr.f32.gmra.mxu0 %v80
  %v230 = vpop.f32.mrf.mxu0
  %v231 = vadd.f32 %v156, %v230
  %v232 = vpop.f32.mrf.mxu0
  %233 = vmatprep.mubr.f32.mxu0 0.0
  %234 = vmatmul.mubr.f32.gmra.mxu0 %v83
  %v235 = vpop.f32.mrf.mxu0
  %v236 = vadd.f32 %v161, %v235
  %v237 = vpop.f32.mrf.mxu0
  %238 = vdwg.mxu0
  %v239 = vmax.f32 %v231, 0.0
  %v240 = vmax.f32 %v236, 0.0
  %v241 = vld [vmem:[%s3] sm:$0xff]
  %v242 = vld [vmem:[%s3 + $0x8] sm:$0xff]
  %v243 = vld [vmem:[%s3 + $0x10] sm:$0xff]
  %v244 = vld [vmem:[%s3 + $0x18] sm:$0xff]
  %v245 = vld [vmem:[%s3 + $0x20] sm:$0xff]
  %v246 = vld [vmem:[%s3 + $0x28] sm:$0xff]
  %v247 = vld [vmem:[%s3 + $0x30] sm:$0xff]
  %v248 = vld [vmem:[%s3 + $0x38] sm:$0xff]
  %v249 = vld [vmem:[%s4] sm:$0x1]
  %v251 = vlaneseq
  %v252 = vshrl.u32 %v251, 7
  %v253 = vsub.s32 0, %v252
  %v254 = vrot.slane %v249, %v253
  %vm256 = vcmask 523264
  %v258 = vsel %vm256, %v239, 0
  %v261 = vsel %vm256, %v240, 0
  %263 = vmatprep.subr.mxu0 0.0
  %264 = vmatpush1.msra.mxu0 0.0
  %265 = vmatprep.subr.mxu0 0.0
  %266 = vmatpush1.msra.mxu0 0.0
  %267 = vmatprep.subr.mxu0 0.0
  %268 = vmatpush1.msra.mxu0 0.0
  %269 = vmatprep.subr.mxu0 0.0
  %270 = vmatpush1.msra.mxu0 0.0
  %271 = vmatprep.subr.mxu0 0.0
  %272 = vmatpush1.msra.mxu0 0.0
  %273 = vmatprep.subr.mxu0 0.0
  %274 = vmatpush1.msra.mxu0 0.0
  %275 = vmatprep.subr.mxu0 0.0
  %276 = vmatpush1.msra.mxu0 0.0
  %277 = vmatprep.subr.mxu0 0.0
  %278 = vmatpush1.msra.mxu0 0.0
  %279 = vmatprep.subr.mxu0 0.0
  %280 = vmatpush1.msra.mxu0 %v248
  %281 = vmatprep.subr.mxu0 0.0
  %282 = vmatpush1.msra.mxu0 %v247
  %283 = vmatprep.subr.mxu0 0.0
  %284 = vmatpush1.msra.mxu0 %v246
  %285 = vmatprep.subr.mxu0 0.0
  %286 = vmatpush1.msra.mxu0 %v245
  %287 = vmatprep.subr.mxu0 0.0
  %288 = vmatpush1.msra.mxu0 %v244
  %289 = vmatprep.subr.mxu0 0.0
  %290 = vmatpush1.msra.mxu0 %v243
  %291 = vmatprep.subr.mxu0 0.0
  %292 = vmatpush1.msra.mxu0 %v242
  %293 = vmatprep.subr.mxu0 0.0
  %294 = vmatpush1.msra.mxu0 %v241
  %295 = vmatprep.subr.mxu0 0.0
  %296 = vmatpush2.msra.mxu0 0.0
  %297 = vmatprep.subr.mxu0 0.0
  %298 = vmatpush2.msra.mxu0 0.0
  %299 = vmatprep.subr.mxu0 0.0
  %300 = vmatpush2.msra.mxu0 0.0
  %301 = vmatprep.subr.mxu0 0.0
  %302 = vmatpush2.msra.mxu0 0.0
  %303 = vmatprep.subr.mxu0 0.0
  %304 = vmatpush2.msra.mxu0 0.0
  %305 = vmatprep.subr.mxu0 0.0
  %306 = vmatpush2.msra.mxu0 0.0
  %307 = vmatprep.subr.mxu0 0.0
  %308 = vmatpush2.msra.mxu0 0.0
  %309 = vmatprep.subr.mxu0 0.0
  %310 = vmatpush2.msra.mxu0 0.0
  %311 = vmatprep.subr.mxu0 0.0
  %312 = vmatpush2.msra.mxu0 0.0
  %313 = vmatprep.subr.mxu0 0.0
  %314 = vmatpush2.msra.mxu0 0.0
  %315 = vmatprep.subr.mxu0 0.0
  %316 = vmatpush2.msra.mxu0 0.0
  %317 = vmatprep.subr.mxu0 0.0
  %318 = vmatpush2.msra.mxu0 0.0
  %319 = vmatprep.subr.mxu0 0.0
  %320 = vmatpush2.msra.mxu0 0.0
  %321 = vmatprep.subr.mxu0 0.0
  %322 = vmatpush2.msra.mxu0 0.0
  %323 = vmatprep.subr.mxu0 0.0
  %324 = vmatpush2.msra.mxu0 0.0
  %325 = vmatprep.subr.mxu0 0.0
  %326 = vmatpush2.msra.mxu0 0.0
  %327 = vmatprep.mubr.f32.mxu0 0.0
  %328 = vmatmul.mubr.f32.gmra.mxu0 %v258
  %v329 = vpop.f32.mrf.mxu0
  %v330 = vadd.f32 %v254, %v329
  %v331 = vpop.f32.mrf.mxu0
  %332 = vmatprep.mubr.f32.mxu0 0.0
  %333 = vmatmul.mubr.f32.gmra.mxu0 %v261
  %v334 = vpop.f32.mrf.mxu0
  %v335 = vadd.f32 %v254, %v334
  %v336 = vpop.f32.mrf.mxu0
  %337 = vdwg.mxu0
  %v338 = vmax.f32 %v330, 0.0
  %v339 = vmax.f32 %v335, 0.0
  %v340 = vld [vmem:[%s5] sm:$0xff]
  %v341 = vld [vmem:[%s5 + $0x8] sm:$0xff]
  %v342 = vld [vmem:[%s5 + $0x10] sm:$0xff]
  %v343 = vld [vmem:[%s5 + $0x18] sm:$0xff]
  %v344 = vld [vmem:[%s6] sm:$0x1]
  %v346 = vlaneseq
  %v347 = vshrl.u32 %v346, 7
  %v348 = vsub.s32 0, %v347
  %v349 = vrot.slane %v344, %v348
  %vm351 = vcmask 261120
  %v353 = vsel %vm351, %v338, 0
  %v356 = vsel %vm351, %v339, 0
  %358 = vmatprep.subr.mxu0 0.0
  %359 = vmatpush1.msra.mxu0 0.0
  %360 = vmatprep.subr.mxu0 0.0
  %361 = vmatpush1.msra.mxu0 0.0
  %362 = vmatprep.subr.mxu0 0.0
  %363 = vmatpush1.msra.mxu0 0.0
  %364 = vmatprep.subr.mxu0 0.0
  %365 = vmatpush1.msra.mxu0 0.0
  %366 = vmatprep.subr.mxu0 0.0
  %367 = vmatpush1.msra.mxu0 0.0
  %368 = vmatprep.subr.mxu0 0.0
  %369 = vmatpush1.msra.mxu0 0.0
  %370 = vmatprep.subr.mxu0 0.0
  %371 = vmatpush1.msra.mxu0 0.0
  %372 = vmatprep.subr.mxu0 0.0
  %373 = vmatpush1.msra.mxu0 0.0
  %374 = vmatprep.subr.mxu0 0.0
  %375 = vmatpush1.msra.mxu0 0.0
  %376 = vmatprep.subr.mxu0 0.0
  %377 = vmatpush1.msra.mxu0 0.0
  %378 = vmatprep.subr.mxu0 0.0
  %379 = vmatpush1.msra.mxu0 0.0
  %380 = vmatprep.subr.mxu0 0.0
  %381 = vmatpush1.msra.mxu0 0.0
  %382 = vmatprep.subr.mxu0 0.0
  %383 = vmatpush1.msra.mxu0 %v343
  %384 = vmatprep.subr.mxu0 0.0
  %385 = vmatpush1.msra.mxu0 %v342
  %386 = vmatprep.subr.mxu0 0.0
  %387 = vmatpush1.msra.mxu0 %v341
  %388 = vmatprep.subr.mxu0 0.0
  %389 = vmatpush1.msra.mxu0 %v340
  %390 = vmatprep.subr.mxu0 0.0
  %391 = vmatpush2.msra.mxu0 0.0
  %392 = vmatprep.subr.mxu0 0.0
  %393 = vmatpush2.msra.mxu0 0.0
  %394 = vmatprep.subr.mxu0 0.0
  %395 = vmatpush2.msra.mxu0 0.0
  %396 = vmatprep.subr.mxu0 0.0
  %397 = vmatpush2.msra.mxu0 0.0
  %398 = vmatprep.subr.mxu0 0.0
  %399 = vmatpush2.msra.mxu0 0.0
  %400 = vmatprep.subr.mxu0 0.0
  %401 = vmatpush2.msra.mxu0 0.0
  %402 = vmatprep.subr.mxu0 0.0
  %403 = vmatpush2.msra.mxu0 0.0
  %404 = vmatprep.subr.mxu0 0.0
  %405 = vmatpush2.msra.mxu0 0.0
  %406 = vmatprep.subr.mxu0 0.0
  %407 = vmatpush2.msra.mxu0 0.0
  %408 = vmatprep.subr.mxu0 0.0
  %409 = vmatpush2.msra.mxu0 0.0
  %410 = vmatprep.subr.mxu0 0.0
  %411 = vmatpush2.msra.mxu0 0.0
  %412 = vmatprep.subr.mxu0 0.0
  %413 = vmatpush2.msra.mxu0 0.0
  %414 = vmatprep.subr.mxu0 0.0
  %415 = vmatpush2.msra.mxu0 0.0
  %416 = vmatprep.subr.mxu0 0.0
  %417 = vmatpush2.msra.mxu0 0.0
  %418 = vmatprep.subr.mxu0 0.0
  %419 = vmatpush2.msra.mxu0 0.0
  %420 = vmatprep.subr.mxu0 0.0
  %421 = vmatpush2.msra.mxu0 0.0
  %422 = vmatprep.mubr.f32.mxu0 0.0
  %423 = vmatmul.mubr.f32.gmra.mxu0 %v353
  %v424 = vpop.f32.mrf.mxu0
  %v425 = vadd.f32 %v349, %v424
  %v426 = vpop.f32.mrf.mxu0
  %427 = vmatprep.mubr.f32.mxu0 0.0
  %428 = vmatmul.mubr.f32.gmra.mxu0 %v356
  %v429 = vpop.f32.mrf.mxu0
  %v430 = vadd.f32 %v349, %v429
  %v431 = vpop.f32.mrf.mxu0
  %432 = vdwg.mxu0
  %vm433 = vcmask 31744
  %v434 = vsel %vm433, %v425, -inf
  %435 = vmax.xlane.f32.xlu0 %v434
  %v436 = vpop.xlane.xlu0 %435
  %v437 = vsel %vm433, %v430, -inf
  %438 = vmax.xlane.f32.xlu0 %v437
  %v439 = vpop.xlane.xlu0 %438
  %v440 = vsub.f32 %v425, %v436
  %v441 = vsub.f32 %v430, %v439
  %v442 = vmul.f32 %v440, 1.442695
  %v443 = vpow.pop %v442
  %v444 = vmul.f32 %v441, 1.442695
  %v445 = vpow.pop %v444
  %v446 = vsel %vm433, %v443, 0.0
  %447 = vadd.xlane.f32.xlu0 %v446
  %v448 = vpop.xlane.xlu0 %447
  %v449 = vsel %vm433, %v445, 0.0
  %450 = vadd.xlane.f32.xlu0 %v449
  %v451 = vpop.xlane.xlu0 %450
  %v452 = vrcp.pop %v448
  %v453 = vmul.f32 %v443, %v452
  %v454 = vrcp.pop %v451
  %v455 = vmul.f32 %v445, %v454
  %456 = vst [vmem:[%s7] sm:$0xff] 0.0
  %457 = vst [vmem:[%s7 + $0x8] sm:$0xff] 0.0
  %458 = vst.msk [vmem:[%s7] sm:$0xff] %vm351, %v338
  %459 = vst.msk [vmem:[%s7 + $0x8] sm:$0xff] %vm351, %v339
  %462 = vrot.lane.b32.xlu0 %v425, 32
  %v463 = vpop.permute.xlu0 %462
  %464 = vrot.lane.b32.xlu0 %v430, 32
  %v465 = vpop.permute.xlu0 %464
  %vm468 = vcmask 294144
  %469 = vst.msk [vmem:[%s7] sm:$0xff] %vm468, %v463
  %470 = vst.msk [vmem:[%s7 + $0x8] sm:$0xff] %vm468, %v465
  %473 = vrot.lane.b32.xlu0 %v453, 36
  %v474 = vpop.permute.xlu0 %473
  %475 = vrot.lane.b32.xlu0 %v455, 36
  %v476 = vpop.permute.xlu0 %475
  %vm479 = vcmask 326944
  %480 = vst.msk [vmem:[%s7] sm:$0xff] %vm479, %v474
  %481 = vst.msk [vmem:[%s7 + $0x8] sm:$0xff] %vm479, %v476
  // Predicated region
  $region30: #{domain_adaption_forward.1} parent=0 // pred_check
    _
  $region31: #{domain_adaption_forward.1} parent=0 // pred_check_branch
    %483 = sbr.rel (0) target = $region33
  $region32: #{domain_adaption_forward.1} parent=0 // pred_region
    _
  $region33: #{domain_adaption_forward.1} parent=0 // pred_fallthru
    _
  // Predicated region
  $region34: #{domain_adaption_forward.1} parent=0 // pred_check
    _
  $region35: #{domain_adaption_forward.1} parent=0 // pred_check_branch
    %485 = sbr.rel (0) target = $region37
  $region36: #{domain_adaption_forward.1} parent=0 // pred_region
    _
  $region37: #{domain_adaption_forward.1} parent=0 // pred_fallthru
    _

</llo_original>
